<compile_context>
chip_gen: v5e
topology: v5e:2x2
jax: 0.10.0
libtpu: 0.0.40
codegen_flags: <defaults>
</compile_context>

<pallas_src>
import math
from functools import partial

import jax
import jax.numpy as jnp
from jax import lax
from jax.experimental import pallas as pl
from jax.experimental.pallas import tpu as pltpu


def _resblock_kernel(main_ref, top_ref, bot_ref, w_ref, shift_ref, o_ref,
                     ft_ref, patch_ref, *, rows_lanes):
    """One (batch, row-block) tile per grid step.

    main_ref : (1, C, Lb)      f32  W-padded rows of x, lane-flattened with row
                                    stride W+2 (first `rows_lanes` lanes real).
                                    Also carries the residual.
    top_ref  : (1, 1, C, W+2)  f32  reflection-padded row above the block.
    bot_ref  : (1, 1, C, W+2)  f32  reflection-padded row below the block.
    w_ref    : (C, 9C)         bf16 conv weight with BN scale folded in,
                                    K ordered tap-major / cin-minor.
    shift_ref: (C, 1)          f32  folded shift ((bias - mean) * scale + beta).
    o_ref    : (1, C, Lb)           output tile (Lb is a 128-multiple or the
                                    full extent -> lane-dense stores).
    ft_ref   : (C, Lb + 2*(W+2) + 2)   f32 scratch: halo'd flat tile.
    patch_ref: (9C, Lb)               f32 scratch: im2col patch matrix.
    """
    c = main_ref.shape[1]
    lb = main_ref.shape[2]
    wp2 = top_ref.shape[3]

    # Assemble the halo'd, lane-flattened tile in VMEM:
    #   [ top halo row | Hb real block rows | bottom halo row | zero pad ]
    # ft[u*(W+2) + v] == xp[block_row0 + u, v] for the rows that matter.
    ft_ref[:, 0:wp2] = top_ref[0, 0]
    ft_ref[:, wp2:wp2 + rows_lanes] = main_ref[0, :, 0:rows_lanes]
    ft_ref[:, wp2 + rows_lanes:wp2 + rows_lanes + wp2] = bot_ref[0, 0]
    n_tail = lb - rows_lanes + 2
    ft_ref[:, wp2 + rows_lanes + wp2:] = jnp.zeros((c, n_tail), ft_ref.dtype)

    # In-VMEM im2col: tap (dh, dw) of output flat position p is
    # ft[p + dh*(W+2) + dw].  Nine lane-shifted views stacked into (9C, Lb).
    for t in range(9):
        dh, dw = t // 3, t % 3
        off = dh * wp2 + dw
        patch_ref[t * c:(t + 1) * c, :] = ft_ref[:, off:off + lb]

    # Single K=9C GEMM on the MXU (bf16 operands, f32 accumulation).
    acc = jnp.dot(w_ref[...], patch_ref[...].astype(jnp.bfloat16),
                  preferred_element_type=jnp.float32)          # (C, Lb)

    # Residual == centre tap == x at every valid output pixel (exact f32).
    residual = ft_ref[:, wp2 + 1:wp2 + 1 + lb]

    # f32 epilogue on the VPU: folded bias/BN shift, ReLU, residual add.
    y = jnp.maximum(acc + shift_ref[...], 0.0) + residual
    o_ref[0] = y.astype(o_ref.dtype)


def _choose_row_block(n, h, w, c, vmem_budget_bytes=20 * 2**20):
    """Rows of the image processed per grid step.

    When H is tiled, the block's flattened lane extent Hb*(W+2) must be a
    multiple of 128 (lane-dense, unmasked stores); a single full-extent block
    is always legal.  Hb is sized from a conservative per-step VMEM estimate so
    double-buffered blocks stay inside the scoped VMEM limit on every
    generation (v7x has only 64 MiB physical VMEM vs 128 MiB on v5e/v6e).
    """
    wp2 = w + 2
    # ~VMEM bytes per block row: double-buffered f32 in/out (8+8 B/elem),
    # f32 halo'd tile + f32/bf16 patch matrix (~58 B/elem), f32 acc/result.
    bytes_per_row = 90 * c * wp2
    max_rows = max(int(vmem_budget_bytes // bytes_per_row), 1)
    q = 128 // math.gcd(wp2, 128)        # Hb must be a multiple of q if tiling
    if h <= max_rows:
        if n >= 2 or q >= h:
            return h, 1                  # one full-extent block per image
        # Single image, no VMEM pressure: still split rows so the (N, j) grid
        # has >= 2 steps and both v7x TensorCores get work.
        hb = q * max(1, h // (2 * q))
    else:
        hb = max(q, (max_rows // q) * q)
        # TODO(synk): for very large W where (W+2) shares almost no factor with
        # 128, the minimum legal Hb (= q) can still exceed the budget; such
        # shapes would additionally need a W split.
    return hb, -(-h // hb)


def resblock(x, weight_oihw, bias, bn_gamma, bn_beta, bn_mean, bn_var,
             eps: float = 1e-5):
    """Pallas implementation of ResBlock.forward (inference-mode BatchNorm).

    x:           (N, C, H, W)   float32, NCHW (PyTorch convention)
    weight_oihw: (C, C, 3, 3)
    bias, bn_*:  (C,)
    returns:     (N, C, H, W)
    """
    n, cin, h, w = x.shape
    cout = weight_oihw.shape[0]
    assert cout == cin, "ResBlock requires n_out == n_in for the residual add"
    wp2 = w + 2

    hb, num_j = _choose_row_block(n, h, w, cin)
    hpad = hb * num_j

    # Reflection pad (the only wrapper-side data expansion, ~(H+2)(W+2)/(HW)),
    # plus junk rows at the bottom if H does not divide evenly into row blocks.
    xp = jnp.pad(x, ((0, 0), (0, 0), (1, 1), (1, 1)), mode="reflect")
    if hpad > h:
        xp = jnp.pad(xp, ((0, 0), (0, 0), (0, hpad - h), (0, 0)))

    # Main stream: W-padded rows, flattened (free reshape) so pixels sit on the
    # lane axis with row stride W+2.  This same stream carries the residual.
    xw = xp[:, :, 1:hpad + 1, :]                       # (N, C, hpad, W+2)
    rows_total = hpad * wp2
    xwf = xw.reshape(n, cin, rows_total)

    # Per-block lane extent: multiple of 128 (unmasked stores).  With num_j > 1
    # it already is by construction; for a single block pad the flat axis.
    rows_lanes = hb * wp2
    if num_j == 1:
        lb = ((rows_lanes + 127) // 128) * 128
        if lb > rows_total:
            xwf = jnp.pad(xwf, ((0, 0), (0, 0), (0, lb - rows_total)))
    else:
        lb = rows_lanes
    flat_len = num_j * lb

    # Halo rows (one above / one below each row block), gathered in the wrapper
    # (2/Hb extra reads; the vertical reflection is resolved here for free).
    top_rows = jnp.arange(num_j, dtype=jnp.int32) * hb          # xp row indices
    bot_rows = top_rows + hb + 1
    top = jnp.transpose(jnp.take(xp, top_rows, axis=2), (0, 2, 1, 3))
    bot = jnp.transpose(jnp.take(xp, bot_rows, axis=2), (0, 2, 1, 3))

    # Fold conv bias + BatchNorm (running stats) into the weight and a shift.
    scale = (bn_gamma / jnp.sqrt(bn_var + eps)).astype(jnp.float32)
    shift = ((bias - bn_mean) * scale + bn_beta).astype(jnp.float32)
    w2d = jnp.transpose(weight_oihw, (0, 2, 3, 1)).reshape(cout, 9 * cin)
    w2d = (w2d * scale[:, None]).astype(jnp.bfloat16)   # BN scale folded pre-cast
    shift2d = shift.reshape(cout, 1)

    out_flat = pl.pallas_call(
        partial(_resblock_kernel, rows_lanes=rows_lanes),
        out_shape=jax.ShapeDtypeStruct((n, cout, flat_len), x.dtype),
        grid=(n, num_j),
        in_specs=[
            pl.BlockSpec((1, cin, lb), lambda i, j: (i, 0, j)),
            pl.BlockSpec((1, 1, cin, wp2), lambda i, j: (i, j, 0, 0)),
            pl.BlockSpec((1, 1, cin, wp2), lambda i, j: (i, j, 0, 0)),
            pl.BlockSpec((cout, 9 * cin), lambda i, j: (0, 0)),
            pl.BlockSpec((cout, 1), lambda i, j: (0, 0)),
        ],
        out_specs=pl.BlockSpec((1, cout, lb), lambda i, j: (i, 0, j)),
        scratch_shapes=[
            pltpu.VMEM((cin, lb + 2 * wp2 + 2), jnp.float32),   # halo'd tile
            pltpu.VMEM((9 * cin, lb), jnp.float32),             # im2col patch
        ],
        compiler_params=pltpu.CompilerParams(
            dimension_semantics=("parallel", "parallel"),
            vmem_limit_bytes=48 * 1024 * 1024),   # safe on v7x (64 MiB phys) too
    )(xwf, top, bot, w2d, shift2d)

    out = out_flat[:, :, :rows_total].reshape(n, cout, hpad, wp2)
    return out[:, :, :h, :w]                      # drop junk rows / columns


def _reference(x, weight_oihw, bias, bn_gamma, bn_beta, bn_mean, bn_var,
               eps: float = 1e-5):
    """Pure-JAX reference for ResBlock.forward (eval-mode BatchNorm), using the
    same numerics as the kernel: BN scale folded into a bf16 conv weight, f32
    accumulation, f32 residual.  (Vs. a pure-f32 PyTorch conv the bf16 matmul
    introduces ~1e-3-level differences that grow with C.)"""
    scale = bn_gamma / jnp.sqrt(bn_var + eps)
    shift = (bias - bn_mean) * scale + bn_beta
    w_folded = (weight_oihw * scale[:, None, None, None]).astype(jnp.bfloat16)
    xp = jnp.pad(x, ((0, 0), (0, 0), (1, 1), (1, 1)), mode="reflect")
    y = lax.conv_general_dilated(
        xp.astype(jnp.bfloat16), w_folded,
        window_strides=(1, 1), padding="VALID",
        dimension_numbers=("NCHW", "OIHW", "NCHW"),
        preferred_element_type=jnp.float32)
    y = jnp.maximum(y + shift[None, :, None, None], 0.0)
    return (y + x).astype(x.dtype)


if __name__ == "__main__":
    # Small shapes consistent with the module: batch=2, n_in=4, 16x16 spatial.
    N, C, H, W = 2, 4, 16, 16

    key = jax.random.PRNGKey(0)
    ks = jax.random.split(key, 7)
    x = jax.random.normal(ks[0], (N, C, H, W), dtype=jnp.float32)
    weight = jax.random.normal(ks[1], (C, C, 3, 3), dtype=jnp.float32) * 0.1
    bias = jax.random.normal(ks[2], (C,), dtype=jnp.float32) * 0.1
    bn_gamma = 1.0 + 0.1 * jax.random.normal(ks[3], (C,), dtype=jnp.float32)
    bn_beta = 0.1 * jax.random.normal(ks[4], (C,), dtype=jnp.float32)
    bn_mean = 0.1 * jax.random.normal(ks[5], (C,), dtype=jnp.float32)
    bn_var = jnp.abs(1.0 + 0.1 * jax.random.normal(ks[6], (C,), dtype=jnp.float32))

    out = jax.block_until_ready(
        resblock(x, weight, bias, bn_gamma, bn_beta, bn_mean, bn_var))
    ref = jax.block_until_ready(
        _reference(x, weight, bias, bn_gamma, bn_beta, bn_mean, bn_var))

    assert out.shape == (N, C, H, W), out.shape
    max_err = float(jnp.max(jnp.abs(out - ref)))
    assert jnp.allclose(out, ref, atol=1e-4, rtol=1e-4), max_err

    print("KERNEL_OK")
</pallas_src>

<mosaic_0001>
module attributes {stable_mosaic.version = 11 : i64} {
  func.func @_resblock_kernel(%arg0: i32, %arg1: i32, %arg2: memref<1x4x384xf32, #tpu.memory_space<vmem>>, %arg3: memref<1x1x4x18xf32, #tpu.memory_space<vmem>>, %arg4: memref<1x1x4x18xf32, #tpu.memory_space<vmem>>, %arg5: memref<4x36xbf16, #tpu.memory_space<vmem>>, %arg6: memref<4x1xf32, #tpu.memory_space<vmem>>, %arg7: memref<1x4x384xf32, #tpu.memory_space<vmem>>, %arg8: memref<4x422xf32, #tpu.memory_space<vmem>>, %arg9: memref<36x384xf32, #tpu.memory_space<vmem>>) attributes {dimension_semantics = [#tpu.dimension_semantics<parallel>, #tpu.dimension_semantics<parallel>], iteration_bounds = array<i64: 2, 1>, scalar_prefetch = 0 : i64, scratch_operands = 2 : i64, tpu.core_type = #tpu.core_type<tc>, window_params = [{transform_indices = @transform_0, window_bounds = array<i64: 1, 4, 384>}, {transform_indices = @transform_1, window_bounds = array<i64: 1, 1, 4, 18>}, {transform_indices = @transform_2, window_bounds = array<i64: 1, 1, 4, 18>}, {pipeline_mode = #tpu.pipeline_mode<synchronous>, transform_indices = @transform_3, window_bounds = array<i64: 4, 36>}, {pipeline_mode = #tpu.pipeline_mode<synchronous>, transform_indices = @transform_4, window_bounds = array<i64: 4, 1>}, {transform_indices = @transform_5, window_bounds = array<i64: 1, 4, 384>}]} {
    %c0 = arith.constant 0 : index
    %c0_0 = arith.constant 0 : index
    %c0_1 = arith.constant 0 : index
    %c0_2 = arith.constant 0 : index
    %0 = vector.load %arg3[%c0, %c0_0, %c0_1, %c0_2] : memref<1x1x4x18xf32, #tpu.memory_space<vmem>>, vector<1x1x4x18xf32>
    %1 = vector.shape_cast %0 : vector<1x1x4x18xf32> to vector<4x18xf32>
    %c0_3 = arith.constant 0 : index
    %c0_4 = arith.constant 0 : index
    %2 = vector.load %arg8[%c0_3, %c0_4] : memref<4x422xf32, #tpu.memory_space<vmem>>, vector<4x18xf32>
    tpu.vector_store %arg8[%c0_3, %c0_4], %1 {strides = array<i32>} : memref<4x422xf32, #tpu.memory_space<vmem>>, vector<4x18xf32>,
    %c0_5 = arith.constant 0 : index
    %c0_6 = arith.constant 0 : index
    %c0_7 = arith.constant 0 : index
    %3 = vector.load %arg2[%c0_5, %c0_6, %c0_7] : memref<1x4x384xf32, #tpu.memory_space<vmem>>, vector<1x4x288xf32>
    %4 = vector.shape_cast %3 : vector<1x4x288xf32> to vector<4x288xf32>
    %c0_8 = arith.constant 0 : index
    %c18 = arith.constant 18 : index
    %5 = vector.load %arg8[%c0_8, %c18] : memref<4x422xf32, #tpu.memory_space<vmem>>, vector<4x288xf32>
    tpu.vector_store %arg8[%c0_8, %c18], %4 {strides = array<i32>} : memref<4x422xf32, #tpu.memory_space<vmem>>, vector<4x288xf32>,
    %c0_9 = arith.constant 0 : index
    %c0_10 = arith.constant 0 : index
    %c0_11 = arith.constant 0 : index
    %c0_12 = arith.constant 0 : index
    %6 = vector.load %arg4[%c0_9, %c0_10, %c0_11, %c0_12] : memref<1x1x4x18xf32, #tpu.memory_space<vmem>>, vector<1x1x4x18xf32>
    %7 = vector.shape_cast %6 : vector<1x1x4x18xf32> to vector<4x18xf32>
    %c0_13 = arith.constant 0 : index
    %c306 = arith.constant 306 : index
    %8 = vector.load %arg8[%c0_13, %c306] : memref<4x422xf32, #tpu.memory_space<vmem>>, vector<4x18xf32>
    tpu.vector_store %arg8[%c0_13, %c306], %7 {strides = array<i32>} : memref<4x422xf32, #tpu.memory_space<vmem>>, vector<4x18xf32>,
    %cst = arith.constant 0.000000e+00 : f32
    %9 = vector.broadcast %cst : f32 to vector<4x98xf32>
    %c0_14 = arith.constant 0 : index
    %c324 = arith.constant 324 : index
    %10 = vector.load %arg8[%c0_14, %c324] : memref<4x422xf32, #tpu.memory_space<vmem>>, vector<4x98xf32>
    tpu.vector_store %arg8[%c0_14, %c324], %9 {strides = array<i32>} : memref<4x422xf32, #tpu.memory_space<vmem>>, vector<4x98xf32>,
    %c0_15 = arith.constant 0 : index
    %c0_16 = arith.constant 0 : index
    %11 = vector.load %arg8[%c0_15, %c0_16] : memref<4x422xf32, #tpu.memory_space<vmem>>, vector<4x384xf32>
    %c0_17 = arith.constant 0 : index
    %c0_18 = arith.constant 0 : index
    %12 = vector.load %arg9[%c0_17, %c0_18] : memref<36x384xf32, #tpu.memory_space<vmem>>, vector<4x384xf32>
    tpu.vector_store %arg9[%c0_17, %c0_18], %11 {strides = array<i32>} : memref<36x384xf32, #tpu.memory_space<vmem>>, vector<4x384xf32>,
    %c0_19 = arith.constant 0 : index
    %c1 = arith.constant 1 : index
    %13 = vector.load %arg8[%c0_19, %c1] : memref<4x422xf32, #tpu.memory_space<vmem>>, vector<4x384xf32>
    %c4 = arith.constant 4 : index
    %c0_20 = arith.constant 0 : index
    %14 = vector.load %arg9[%c4, %c0_20] : memref<36x384xf32, #tpu.memory_space<vmem>>, vector<4x384xf32>
    tpu.vector_store %arg9[%c4, %c0_20], %13 {strides = array<i32>} : memref<36x384xf32, #tpu.memory_space<vmem>>, vector<4x384xf32>,
    %c0_21 = arith.constant 0 : index
    %c2 = arith.constant 2 : index
    %15 = vector.load %arg8[%c0_21, %c2] : memref<4x422xf32, #tpu.memory_space<vmem>>, vector<4x384xf32>
    %c8 = arith.constant 8 : index
    %c0_22 = arith.constant 0 : index
    %16 = vector.load %arg9[%c8, %c0_22] : memref<36x384xf32, #tpu.memory_space<vmem>>, vector<4x384xf32>
    tpu.vector_store %arg9[%c8, %c0_22], %15 {strides = array<i32>} : memref<36x384xf32, #tpu.memory_space<vmem>>, vector<4x384xf32>,
    %c0_23 = arith.constant 0 : index
    %c18_24 = arith.constant 18 : index
    %17 = vector.load %arg8[%c0_23, %c18_24] : memref<4x422xf32, #tpu.memory_space<vmem>>, vector<4x384xf32>
    %c12 = arith.constant 12 : index
    %c0_25 = arith.constant 0 : index
    %18 = vector.load %arg9[%c12, %c0_25] : memref<36x384xf32, #tpu.memory_space<vmem>>, vector<4x384xf32>
    tpu.vector_store %arg9[%c12, %c0_25], %17 {strides = array<i32>} : memref<36x384xf32, #tpu.memory_space<vmem>>, vector<4x384xf32>,
    %c0_26 = arith.constant 0 : index
    %c19 = arith.constant 19 : index
    %19 = vector.load %arg8[%c0_26, %c19] : memref<4x422xf32, #tpu.memory_space<vmem>>, vector<4x384xf32>
    %c16 = arith.constant 16 : index
    %c0_27 = arith.constant 0 : index
    %20 = vector.load %arg9[%c16, %c0_27] : memref<36x384xf32, #tpu.memory_space<vmem>>, vector<4x384xf32>
    tpu.vector_store %arg9[%c16, %c0_27], %19 {strides = array<i32>} : memref<36x384xf32, #tpu.memory_space<vmem>>, vector<4x384xf32>,
    %c0_28 = arith.constant 0 : index
    %c20 = arith.constant 20 : index
    %21 = vector.load %arg8[%c0_28, %c20] : memref<4x422xf32, #tpu.memory_space<vmem>>, vector<4x384xf32>
    %c20_29 = arith.constant 20 : index
    %c0_30 = arith.constant 0 : index
    %22 = vector.load %arg9[%c20_29, %c0_30] : memref<36x384xf32, #tpu.memory_space<vmem>>, vector<4x384xf32>
    tpu.vector_store %arg9[%c20_29, %c0_30], %21 {strides = array<i32>} : memref<36x384xf32, #tpu.memory_space<vmem>>, vector<4x384xf32>,
    %c0_31 = arith.constant 0 : index
    %c36 = arith.constant 36 : index
    %23 = vector.load %arg8[%c0_31, %c36] : memref<4x422xf32, #tpu.memory_space<vmem>>, vector<4x384xf32>
    %c24 = arith.constant 24 : index
    %c0_32 = arith.constant 0 : index
    %24 = vector.load %arg9[%c24, %c0_32] : memref<36x384xf32, #tpu.memory_space<vmem>>, vector<4x384xf32>
    tpu.vector_store %arg9[%c24, %c0_32], %23 {strides = array<i32>} : memref<36x384xf32, #tpu.memory_space<vmem>>, vector<4x384xf32>,
    %c0_33 = arith.constant 0 : index
    %c37 = arith.constant 37 : index
    %25 = vector.load %arg8[%c0_33, %c37] : memref<4x422xf32, #tpu.memory_space<vmem>>, vector<4x384xf32>
    %c28 = arith.constant 28 : index
    %c0_34 = arith.constant 0 : index
    %26 = vector.load %arg9[%c28, %c0_34] : memref<36x384xf32, #tpu.memory_space<vmem>>, vector<4x384xf32>
    tpu.vector_store %arg9[%c28, %c0_34], %25 {strides = array<i32>} : memref<36x384xf32, #tpu.memory_space<vmem>>, vector<4x384xf32>,
    %c0_35 = arith.constant 0 : index
    %c38 = arith.constant 38 : index
    %27 = vector.load %arg8[%c0_35, %c38] : memref<4x422xf32, #tpu.memory_space<vmem>>, vector<4x384xf32>
    %c32 = arith.constant 32 : index
    %c0_36 = arith.constant 0 : index
    %28 = vector.load %arg9[%c32, %c0_36] : memref<36x384xf32, #tpu.memory_space<vmem>>, vector<4x384xf32>
    tpu.vector_store %arg9[%c32, %c0_36], %27 {strides = array<i32>} : memref<36x384xf32, #tpu.memory_space<vmem>>, vector<4x384xf32>,
    %c0_37 = arith.constant 0 : index
    %c0_38 = arith.constant 0 : index
    %29 = vector.load %arg5[%c0_37, %c0_38] : memref<4x36xbf16, #tpu.memory_space<vmem>>, vector<4x36xbf16>
    %c0_39 = arith.constant 0 : index
    %c0_40 = arith.constant 0 : index
    %30 = vector.load %arg9[%c0_39, %c0_40] : memref<36x384xf32, #tpu.memory_space<vmem>>, vector<36x384xf32>
    %31 = arith.truncf %30 : vector<36x384xf32> to vector<36x384xbf16>
    %cst_41 = arith.constant dense<0.000000e+00> : vector<4x384xf32>
    %32 = tpu.matmul %29, %31, %cst_41 {dimension_numbers = #tpu.dot_dimension_numbers<[1], [0], [0], [1], [0, 0, 1, 1], [], []>} : vector<4x36xbf16>, vector<36x384xbf16>, vector<4x384xf32> -> vector<4x384xf32>
    %c0_42 = arith.constant 0 : index
    %c19_43 = arith.constant 19 : index
    %33 = vector.load %arg8[%c0_42, %c19_43] : memref<4x422xf32, #tpu.memory_space<vmem>>, vector<4x384xf32>
    %c0_44 = arith.constant 0 : index
    %c0_45 = arith.constant 0 : index
    %34 = vector.load %arg6[%c0_44, %c0_45] : memref<4x1xf32, #tpu.memory_space<vmem>>, vector<4x1xf32>
    %35 = vector.broadcast %34 : vector<4x1xf32> to vector<4x384xf32>
    %36 = arith.addf %32, %35 : vector<4x384xf32>
    %cst_46 = arith.constant 0.000000e+00 : f32
    %37 = vector.broadcast %cst_46 : f32 to vector<4x384xf32>
    %38 = arith.maximumf %36, %37 : vector<4x384xf32>
    %39 = arith.addf %38, %33 : vector<4x384xf32>
    %c0_47 = arith.constant 0 : index
    %c0_48 = arith.constant 0 : index
    %c0_49 = arith.constant 0 : index
    %40 = vector.load %arg7[%c0_47, %c0_48, %c0_49] : memref<1x4x384xf32, #tpu.memory_space<vmem>>, vector<1x4x384xf32>
    %41 = vector.shape_cast %40 : vector<1x4x384xf32> to vector<4x384xf32>
    %42 = vector.shape_cast %39 : vector<4x384xf32> to vector<1x4x384xf32>
    tpu.vector_store %arg7[%c0_47, %c0_48, %c0_49], %42 {strides = array<i32>} : memref<1x4x384xf32, #tpu.memory_space<vmem>>, vector<1x4x384xf32>,
    return
  }
  func.func @transform_0(%arg0: i32, %arg1: i32) -> (i32, i32, i32) {
    %c0_i32 = arith.constant 0 : i32
    %c0_i32_0 = arith.constant 0 : i32
    return %arg0, %c0_i32, %arg1 : i32, i32, i32
  }
  func.func @transform_1(%arg0: i32, %arg1: i32) -> (i32, i32, i32, i32) {
    %c0_i32 = arith.constant 0 : i32
    %c0_i32_0 = arith.constant 0 : i32
    %c0_i32_1 = arith.constant 0 : i32
    return %arg0, %arg1, %c0_i32, %c0_i32_0 : i32, i32, i32, i32
  }
  func.func @transform_2(%arg0: i32, %arg1: i32) -> (i32, i32, i32, i32) {
    %c0_i32 = arith.constant 0 : i32
    %c0_i32_0 = arith.constant 0 : i32
    %c0_i32_1 = arith.constant 0 : i32
    return %arg0, %arg1, %c0_i32, %c0_i32_0 : i32, i32, i32, i32
  }
  func.func @transform_3(%arg0: i32, %arg1: i32) -> (i32, i32) {
    %c0_i32 = arith.constant 0 : i32
    %c0_i32_0 = arith.constant 0 : i32
    %c0_i32_1 = arith.constant 0 : i32
    return %c0_i32, %c0_i32_0 : i32, i32
  }
  func.func @transform_4(%arg0: i32, %arg1: i32) -> (i32, i32) {
    %c0_i32 = arith.constant 0 : i32
    %c0_i32_0 = arith.constant 0 : i32
    %c0_i32_1 = arith.constant 0 : i32
    return %c0_i32, %c0_i32_0 : i32, i32
  }
  func.func @transform_5(%arg0: i32, %arg1: i32) -> (i32, i32, i32) {
    %c0_i32 = arith.constant 0 : i32
    %c0_i32_0 = arith.constant 0 : i32
    return %arg0, %c0_i32, %arg1 : i32, i32, i32
  }
}

</mosaic_0001>

<llo_original>
// kernel: tpu_custom_call.1
$region0: #{tpu_custom_call.1}
  #allocation0 [shape = 'u32[]', space=smem, size = 0x4, offset = 0x4, fixed_abs, tag = 'smem constant byte address 0x4 - core index']
  #allocation1 [shape = 'u32[72,128]{1,0:T(1,128)}', space=vmem, size = 0x9000, scoped, tag = 'internal scratch']
  #allocation2 [shape = 'f32[4,422]{1,0:T(4,128)}', space=vmem, size = 0x2000, scoped, tag = 'scratch operand']
  #allocation3 [shape = 'f32[36,384]{1,0:T(8,128)}', space=vmem, size = 0xf000, scoped, tag = 'scratch operand']
  %s0 = inlined_call_operand.hbm [shape: f32[2,4,384], index: 0, kind: input, shape index: {}]
  %s1 = inlined_call_operand.hbm [shape: f32[2,1,4,18], index: 1, kind: input, shape index: {}]
  %s2 = inlined_call_operand.hbm [shape: f32[2,1,4,18], index: 2, kind: input, shape index: {}]
  %s3 = inlined_call_operand.vmem [shape: bf16[4,36], index: 3, kind: input, shape index: {}]
  %s4 = inlined_call_operand.vmem [shape: f32[4,1], index: 4, kind: input, shape index: {}]
  %s5 = inlined_call_operand.hbm [shape: f32[2,4,384], index: 5, kind: output, shape index: {}]
  %s6 = sld [smem:[#allocation0]]
  $region65: #{tpu_custom_call.1} parent=0
    _
  %s8 = ssub.s32 1, %s6
  %s9 = scalar_select 0, %s8, %s6
  $region1: #{tpu_custom_call.1} parent=0
    #allocation4 [shape = 'u8[12288]{0}', space=vmem, size = 0x3000, scoped, tag = 'input window, operand 0']
    #allocation5 [shape = 's32[2]{0}', space=sflag, size = 0x8, scoped, tag = 'scoped memory for tpu_custom_call.1']
    #allocation6 [shape = 's32[2]{0}', space=sflag, size = 0x8, scoped, tag = 'scoped memory for tpu_custom_call.1']
    #allocation7 [shape = 'u8[4096]{0}', space=vmem, size = 0x1000, scoped, tag = 'input window, operand 1']
    #allocation8 [shape = 's32[2]{0}', space=sflag, size = 0x8, scoped, tag = 'scoped memory for tpu_custom_call.1']
    #allocation9 [shape = 'u8[4096]{0}', space=vmem, size = 0x1000, scoped, tag = 'input window, operand 2']
    #allocation10 [shape = 'u8[12288]{0}', space=vmem, size = 0x3000, scoped, tag = 'output window, operand 0']
    %10 = vsyncpa [#allocation5], 0
    %s11 = scalar_lea.sflag [#allocation5], 1
    %12 = vsyncpa %s11, 0
    %13 = vsyncpa [#allocation8], 0
    %s14 = scalar_lea.sflag [#allocation8], 1
    %15 = vsyncpa %s14, 0
    %16 = vsyncpa [#allocation6], 0
    %s17 = scalar_lea.sflag [#allocation6], 1
    %18 = vsyncpa %s17, 0
    loop: start=0, step=1, limit=4
    $region2: #{tpu_custom_call.1} parent=1 // loop_pre_header
      _
    $region3: #{tpu_custom_call.1} parent=1 // loop_header
      %s20 = sphi 0, %s24
      %p21 = scmp.ge.s32.totalorder %s20, 4
      %s27 = sphi 0, %s39
      %s28 = sphi 0, %s35
      %s29 = sphi 0, %s27
      %s30 = sphi 0, %s28
      %s31 = sphi 0, %s29
      %s32 = sphi 0, %s30
      %s44 = sphi 0, %s46
      %s47 = sphi 0, %s44
      %s48 = sphi 0, %s47
      %s64 = sphi 0, %s48
      %s72 = sphi 0, %s74
      %s75 = sphi 0, %s72
      %s76 = sphi 0, %s75
      %s92 = sphi 0, %s76
      %s100 = sphi 0, %s102
      %s103 = sphi 0, %s100
      %s104 = sphi 0, %s103
      %s120 = sphi 0, %s104
      %s124 = sphi 0, %s124
      %s126 = sphi 0, %s124
      %s127 = sphi 0, %s126
      %s141 = sphi 0, %s127
      %s145 = sphi 0, %s145
      %s147 = sphi 0, %s145
      %s148 = sphi 0, %s147
      %s162 = sphi 0, %s148
      %s170 = sphi 0, %s172
      %s173 = sphi 0, %s170
      %s174 = sphi 0, %s173
      %s190 = sphi 0, %s174
    $region4: #{tpu_custom_call.1} parent=1 // loop_header_branch
      %23 = sbr.rel (%p21) target = $region8
    $region5: #{tpu_custom_call.1} parent=1 // loop_body
      %s25 = ssub.s32 %s20, 1
      %s26 = ssub.s32 %s20, 2
      %s33 = sadd.s32 1, %s28
      %p34 = scmp.ge.s32.totalorder %s33, 1
      %s35 = scalar_select %p34, 0, %s33
      %s36 = sadd.s32 1, %s27
      %s37 = scalar_select %p34, %s36, %s27
      %p38 = scmp.ge.s32.totalorder %s37, 2
      %s39 = scalar_select %p38, 0, %s37
      %s40 = ssub.s32 %s27, %s39
      %s41 = ssub.s32 %s28, %s35
      %s42 = sor.u32 %s40, %s41
      %p43 = scmp.eq.s32.totalorder %s42, 0
      %s45 = sadd.s32 %s44, 1
      %s46 = scalar_select %p43, %s44, %s45
      %p49 = pneg %p43
      %p50 = scmp.eq.s32.totalorder %s20, 1
      %p51 = por %p49, %p50
      %p52 = scmp.ne.s32.totalorder %s44, %s47
      %p53 = scmp.eq.s32.totalorder %s20, 0
      %p54 = por %p52, %p53
      %p55 = scmp.ne.s32.totalorder %s44, %s47
      %p56 = scmp.eq.s32.totalorder %s25, 1
      %p57 = por %p55, %p56
      %p58 = scmp.ne.s32.totalorder %s47, %s48
      %p59 = scmp.eq.s32.totalorder %s25, 0
      %p60 = por %p58, %p59
      %p61 = scmp.ne.s32.totalorder %s47, %s48
      %p62 = scmp.eq.s32.totalorder %s26, 1
      %p63 = por %p61, %p62
      %p65 = scmp.ne.s32.totalorder %s48, %s64
      %p66 = scmp.eq.s32.totalorder %s26, 0
      %p67 = por %p65, %p66
      %s68 = ssub.s32 %s27, %s39
      %s69 = ssub.s32 %s28, %s35
      %s70 = sor.u32 %s68, %s69
      %p71 = scmp.eq.s32.totalorder %s70, 0
      %s73 = sadd.s32 %s72, 1
      %s74 = scalar_select %p71, %s72, %s73
      %p77 = pneg %p71
      %p78 = scmp.eq.s32.totalorder %s20, 1
      %p79 = por %p77, %p78
      %p80 = scmp.ne.s32.totalorder %s72, %s75
      %p81 = scmp.eq.s32.totalorder %s20, 0
      %p82 = por %p80, %p81
      %p83 = scmp.ne.s32.totalorder %s72, %s75
      %p84 = scmp.eq.s32.totalorder %s25, 1
      %p85 = por %p83, %p84
      %p86 = scmp.ne.s32.totalorder %s75, %s76
      %p87 = scmp.eq.s32.totalorder %s25, 0
      %p88 = por %p86, %p87
      %p89 = scmp.ne.s32.totalorder %s75, %s76
      %p90 = scmp.eq.s32.totalorder %s26, 1
      %p91 = por %p89, %p90
      %p93 = scmp.ne.s32.totalorder %s76, %s92
      %p94 = scmp.eq.s32.totalorder %s26, 0
      %p95 = por %p93, %p94
      %s96 = ssub.s32 %s27, %s39
      %s97 = ssub.s32 %s28, %s35
      %s98 = sor.u32 %s96, %s97
      %p99 = scmp.eq.s32.totalorder %s98, 0
      %s101 = sadd.s32 %s100, 1
      %s102 = scalar_select %p99, %s100, %s101
      %p105 = pneg %p99
      %p106 = scmp.eq.s32.totalorder %s20, 1
      %p107 = por %p105, %p106
      %p108 = scmp.ne.s32.totalorder %s100, %s103
      %p109 = scmp.eq.s32.totalorder %s20, 0
      %p110 = por %p108, %p109
      %p111 = scmp.ne.s32.totalorder %s100, %s103
      %p112 = scmp.eq.s32.totalorder %s25, 1
      %p113 = por %p111, %p112
      %p114 = scmp.ne.s32.totalorder %s103, %s104
      %p115 = scmp.eq.s32.totalorder %s25, 0
      %p116 = por %p114, %p115
      %p117 = scmp.ne.s32.totalorder %s103, %s104
      %p118 = scmp.eq.s32.totalorder %s26, 1
      %p119 = por %p117, %p118
      %p121 = scmp.ne.s32.totalorder %s104, %s120
      %p122 = scmp.eq.s32.totalorder %s26, 0
      %p123 = por %p121, %p122
      %s125 = sadd.s32 %s124, 1
      %p128 = scmp.eq.s32.totalorder %s20, 1
      %p129 = scmp.ne.s32.totalorder %s124, %s126
      %p130 = scmp.eq.s32.totalorder %s20, 0
      %p131 = por %p129, %p130
      %p132 = scmp.ne.s32.totalorder %s124, %s126
      %p133 = scmp.eq.s32.totalorder %s25, 1
      %p134 = por %p132, %p133
      %p135 = scmp.ne.s32.totalorder %s126, %s127
      %p136 = scmp.eq.s32.totalorder %s25, 0
      %p137 = por %p135, %p136
      %p138 = scmp.ne.s32.totalorder %s126, %s127
      %p139 = scmp.eq.s32.totalorder %s26, 1
      %p140 = por %p138, %p139
      %p142 = scmp.ne.s32.totalorder %s127, %s141
      %p143 = scmp.eq.s32.totalorder %s26, 0
      %p144 = por %p142, %p143
      %s146 = sadd.s32 %s145, 1
      %p149 = scmp.eq.s32.totalorder %s20, 1
      %p150 = scmp.ne.s32.totalorder %s145, %s147
      %p151 = scmp.eq.s32.totalorder %s20, 0
      %p152 = por %p150, %p151
      %p153 = scmp.ne.s32.totalorder %s145, %s147
      %p154 = scmp.eq.s32.totalorder %s25, 1
      %p155 = por %p153, %p154
      %p156 = scmp.ne.s32.totalorder %s147, %s148
      %p157 = scmp.eq.s32.totalorder %s25, 0
      %p158 = por %p156, %p157
      %p159 = scmp.ne.s32.totalorder %s147, %s148
      %p160 = scmp.eq.s32.totalorder %s26, 1
      %p161 = por %p159, %p160
      %p163 = scmp.ne.s32.totalorder %s148, %s162
      %p164 = scmp.eq.s32.totalorder %s26, 0
      %p165 = por %p163, %p164
      %s166 = ssub.s32 %s27, %s39
      %s167 = ssub.s32 %s28, %s35
      %s168 = sor.u32 %s166, %s167
      %p169 = scmp.eq.s32.totalorder %s168, 0
      %s171 = sadd.s32 %s170, 1
      %s172 = scalar_select %p169, %s170, %s171
      %p175 = pneg %p169
      %p176 = scmp.eq.s32.totalorder %s20, 1
      %p177 = por %p175, %p176
      %p178 = scmp.ne.s32.totalorder %s170, %s173
      %p179 = scmp.eq.s32.totalorder %s20, 0
      %p180 = por %p178, %p179
      %p181 = scmp.ne.s32.totalorder %s170, %s173
      %p182 = scmp.eq.s32.totalorder %s25, 1
      %p183 = por %p181, %p182
      %p184 = scmp.ne.s32.totalorder %s173, %s174
      %p185 = scmp.eq.s32.totalorder %s25, 0
      %p186 = por %p184, %p185
      %p187 = scmp.ne.s32.totalorder %s173, %s174
      %p188 = scmp.eq.s32.totalorder %s26, 1
      %p189 = por %p187, %p188
      %p191 = scmp.ne.s32.totalorder %s174, %s190
      %p192 = scmp.eq.s32.totalorder %s26, 0
      %p193 = por %p191, %p192
      %p194 = scmp.le.s32.totalorder 1, %s20
      %p195 = scmp.lt.s32.totalorder %s20, 3
      %p196 = pnand %p194, %p195
      %p197 = pneg %p196
      // Predicated region
      $region9: #{tpu_custom_call.1} parent=5 // pred_check
        _
      $region10: #{tpu_custom_call.1} parent=5 // pred_check_branch
        %199 = sbr.rel (%p196) target = $region12
      $region11: #{tpu_custom_call.1} parent=5 // pred_region
        %s200 = ssub.s32 %s20, 1
        // Predicated region
        $region13: #{tpu_custom_call.1} parent=11 // pred_check
          %p201 = pneg %p137
        $region14: #{tpu_custom_call.1} parent=11 // pred_check_branch
          %203 = sbr.rel (%p201) target = $region16
        $region15: #{tpu_custom_call.1} parent=11 // pred_region
          _
        $region16: #{tpu_custom_call.1} parent=11 // pred_fallthru
          _
        // Predicated region
        $region17: #{tpu_custom_call.1} parent=11 // pred_check
          %p204 = pneg %p158
        $region18: #{tpu_custom_call.1} parent=11 // pred_check_branch
          %206 = sbr.rel (%p204) target = $region20
        $region19: #{tpu_custom_call.1} parent=11 // pred_region
          _
        $region20: #{tpu_custom_call.1} parent=11 // pred_fallthru
          _
      $region12: #{tpu_custom_call.1} parent=5 // pred_fallthru
        _
      %p207 = scmp.lt.s32.totalorder %s20, 2
      // Predicated region
      $region21: #{tpu_custom_call.1} parent=5 // pred_check
        %p208 = pneg %p207
      $region22: #{tpu_custom_call.1} parent=5 // pred_check_branch
        %210 = sbr.rel (%p208) target = $region24
      $region23: #{tpu_custom_call.1} parent=5 // pred_region
        // Predicated region
        $region25: #{tpu_custom_call.1} parent=23 // pred_check
          %p211 = pneg %p54
        $region26: #{tpu_custom_call.1} parent=23 // pred_check_branch
          %213 = sbr.rel (%p211) target = $region28
        $region27: #{tpu_custom_call.1} parent=23 // pred_region
          %s214 = sand.u32 %s44, 1
          %s215 = scalar_lea.sflag [#allocation5], %s214
          %s216 = sand.u32 %s44, 1
          %s217 = smul.addr %s216, 12
          %s218 = scalar_lea.vmem [#allocation4], %s217
          %s219 = smul.u32 3, %s28
          %221 = vsyncadd %s215, 0
          %s222 = smul.addr %s27, 3
          %s223 = sadd.s32 %s219, %s222
          %s224 = smul.addr %s223, 4
          %s225 = scalar_lea.hbm %s0, %s224
          %s227 = sshll.u32 %s225, 4
          %s228 = int_to_ptr.hbm [resolvable:$true] %s227
          %s229 = sshll.u32 %s218, 4
          %s230 = int_to_ptr.vmem [resolvable:$true] %s229
          %232 = dma.hbm_to_vmem [thread:$0]  %s228, 192, %s230, %s215
        $region28: #{tpu_custom_call.1} parent=23 // pred_fallthru
          _
        // Predicated region
        $region29: #{tpu_custom_call.1} parent=23 // pred_check
          %p233 = pneg %p82
        $region30: #{tpu_custom_call.1} parent=23 // pred_check_branch
          %235 = sbr.rel (%p233) target = $region32
        $region31: #{tpu_custom_call.1} parent=23 // pred_region
          %s236 = sand.u32 %s20, 1
          %s237 = scalar_lea.sflag [#allocation8], %s236
          %s238 = sand.u32 %s72, 1
          %s239 = smul.addr %s238, 4
          %s240 = scalar_lea.vmem [#allocation7], %s239
          %242 = vsyncadd %s237, 0
          %s243 = sadd.s32 %s28, %s27
          %s244 = smul.addr %s243, 4
          %s245 = scalar_lea.hbm %s1, %s244
          %s247 = sshll.u32 %s245, 4
          %s248 = int_to_ptr.hbm [resolvable:$true] %s247
          %s249 = sshll.u32 %s240, 4
          %s250 = int_to_ptr.vmem [resolvable:$true] %s249
          %252 = dma.hbm_to_vmem [thread:$0]  %s248, 64, %s250, %s237
        $region32: #{tpu_custom_call.1} parent=23 // pred_fallthru
          _
        // Predicated region
        $region33: #{tpu_custom_call.1} parent=23 // pred_check
          %p253 = pneg %p110
        $region34: #{tpu_custom_call.1} parent=23 // pred_check_branch
          %255 = sbr.rel (%p253) target = $region36
        $region35: #{tpu_custom_call.1} parent=23 // pred_region
          %s256 = sand.u32 %s20, 1
          %s257 = scalar_lea.sflag [#allocation8], %s256
          %s258 = sand.u32 %s100, 1
          %s259 = smul.addr %s258, 4
          %s260 = scalar_lea.vmem [#allocation9], %s259
          %262 = vsyncadd %s257, 0
          %s263 = sadd.s32 %s28, %s27
          %s264 = smul.addr %s263, 4
          %s265 = scalar_lea.hbm %s2, %s264
          %s267 = sshll.u32 %s265, 4
          %s268 = int_to_ptr.hbm [resolvable:$true] %s267
          %s269 = sshll.u32 %s260, 4
          %s270 = int_to_ptr.vmem [resolvable:$true] %s269
          %272 = dma.hbm_to_vmem [thread:$0]  %s268, 64, %s270, %s257
        $region36: #{tpu_custom_call.1} parent=23 // pred_fallthru
          _
      $region24: #{tpu_custom_call.1} parent=5 // pred_fallthru
        _
      %p273 = scmp.le.s32.totalorder 1, %s20
      %p274 = scmp.lt.s32.totalorder %s20, 3
      %p275 = pnand %p273, %p274
      %p276 = pneg %p275
      // Predicated region
      $region37: #{tpu_custom_call.1} parent=5 // pred_check
        _
      $region38: #{tpu_custom_call.1} parent=5 // pred_check_branch
        %278 = sbr.rel (%p275) target = $region40
      $region39: #{tpu_custom_call.1} parent=5 // pred_region
        %s279 = ssub.s32 %s20, 1
        %s280 = sand.u32 %s47, 1
        %s281 = scalar_lea.sflag [#allocation5], %s280
        %s282 = sand.u32 %s47, 1
        %s283 = smul.addr %s282, 12
        %s284 = scalar_lea.vmem [#allocation4], %s283
        // Predicated region
        $region41: #{tpu_custom_call.1} parent=39 // pred_check
          %p285 = pneg %p60
        $region42: #{tpu_custom_call.1} parent=39 // pred_check_branch
          %287 = sbr.rel (%p285) target = $region44
        $region43: #{tpu_custom_call.1} parent=39 // pred_region
          %289 = dma.done %s281, 192
        $region44: #{tpu_custom_call.1} parent=39 // pred_fallthru
          _
        %s290 = sand.u32 %s25, 1
        %s291 = scalar_lea.sflag [#allocation8], %s290
        %s292 = sand.u32 %s75, 1
        %s293 = smul.addr %s292, 4
        %s294 = scalar_lea.vmem [#allocation7], %s293
        // Predicated region
        $region45: #{tpu_custom_call.1} parent=39 // pred_check
          %p295 = pneg %p88
        $region46: #{tpu_custom_call.1} parent=39 // pred_check_branch
          %297 = sbr.rel (%p295) target = $region48
        $region47: #{tpu_custom_call.1} parent=39 // pred_region
          %299 = dma.done %s291, 64
        $region48: #{tpu_custom_call.1} parent=39 // pred_fallthru
          _
        %s300 = sand.u32 %s25, 1
        %s301 = scalar_lea.sflag [#allocation8], %s300
        %s302 = sand.u32 %s103, 1
        %s303 = smul.addr %s302, 4
        %s304 = scalar_lea.vmem [#allocation9], %s303
        // Predicated region
        $region49: #{tpu_custom_call.1} parent=39 // pred_check
          %p305 = pneg %p116
        $region50: #{tpu_custom_call.1} parent=39 // pred_check_branch
          %307 = sbr.rel (%p305) target = $region52
        $region51: #{tpu_custom_call.1} parent=39 // pred_region
          %309 = dma.done %s301, 64
        $region52: #{tpu_custom_call.1} parent=39 // pred_fallthru
          _
        %s310 = sand.u32 %s47, 1
        %s311 = scalar_lea.sflag [#allocation5], %s310
        %s312 = sand.u32 %s47, 1
        %s313 = smul.addr %s312, 12
        %s314 = scalar_lea.vmem [#allocation4], %s313
        %p315 = pneg %p60
        %p316 = pneg %p57
        %s317 = sand.u32 %s25, 1
        %s318 = scalar_lea.sflag [#allocation8], %s317
        %s319 = sand.u32 %s75, 1
        %s320 = smul.addr %s319, 4
        %s321 = scalar_lea.vmem [#allocation7], %s320
        %p322 = pneg %p88
        %p323 = pneg %p85
        %s324 = sand.u32 %s25, 1
        %s325 = scalar_lea.sflag [#allocation8], %s324
        %s326 = sand.u32 %s103, 1
        %s327 = smul.addr %s326, 4
        %s328 = scalar_lea.vmem [#allocation9], %s327
        %p329 = pneg %p116
        %p330 = pneg %p113
        %p331 = pneg %p137
        %p332 = pneg %p134
        %p333 = pneg %p158
        %p334 = pneg %p155
        %p335 = pneg %p186
        %p336 = pneg %p183
        %s337 = sand.u32 %s173, 1
        %s338 = scalar_lea.sflag [#allocation6], %s337
        %s339 = sand.u32 %s173, 1
        %s340 = smul.addr %s339, 12
        %s341 = scalar_lea.vmem [#allocation10], %s340
        %s342 = smul.u32 3, %s30
        %s343 = smul.u32 3, %s30
        %v345 = vld [vmem:[%s294] sm:$0xf]
        %vm346 = vcmask 142336
        %347 = vst.msk [vmem:[#allocation2] sm:$0xf] %vm346, %v345
        %v348 = vld [vmem:[%s284] sm:$0xff]
        %v349 = vld [vmem:[%s284 + $0x8] sm:$0xf]
        %352 = vrot.lane.b32.xlu0 %v348, 18
        %v353 = vpop.permute.xlu0 %352
        %354 = vrot.lane.b32.xlu0 %v349, 18
        %v355 = vpop.permute.xlu0 %354
        %v356 = vrot.slane %v353, 4
        %vm357 = vcmask 146432
        %v358 = vsel %vm357, %v356, %v353
        %v359 = vsel %vm357, %v356, %v355
        %vm362 = vcmask 1043600
        %vm363 = vcmask 1047556
        %vm364 = vmor %vm363, %vm362
        %365 = vst.msk [vmem:[#allocation2] sm:$0xff] %vm364, %v358
        %vm366 = vcmask 404480
        %367 = vst.msk [vmem:[#allocation2 + $0x8] sm:$0xf] %vm366, %v359
        %v368 = vld [vmem:[%s304] sm:$0xf]
        %370 = vrot.lane.b32.xlu0 %v368, 50
        %v371 = vpop.permute.xlu0 %370
        %vm373 = vcmask 552336
        %374 = vst.msk [vmem:[#allocation2 + $0x8] sm:$0xf] %vm373, %v371
        %vm375 = vcmask 1044000
        %vm376 = vcmask 310276
        %vm377 = vmor %vm376, %vm375
        %378 = vst.msk [vmem:[#allocation2 + $0x8] sm:$0xff] %vm377, 0.0
        %v379 = vld [vmem:[#allocation2] sm:$0xff]
        %v380 = vld [vmem:[#allocation2 + $0x8] sm:$0xf]
        %383 = vst [vmem:[#allocation1] ss:$2 sm:$0xff] %v379
        %s384 = scalar_lea.vmem [#allocation1], 16
        %385 = vst [vmem:[%s384] ss:$2 sm:$0xff] %v380
        %v386 = vld.sshfl [vmem:[#allocation1] sm:$0xff pattern:$0x75316420]
        %v387 = vld.sshfl [vmem:[#allocation1 + $0x8] sm:$0xff pattern:$0x75316420]
        %v388 = vld.sshfl [vmem:[#allocation1 + $0x10] sm:$0xff pattern:$0x75316420]
        %392 = vst [vmem:[#allocation3] sm:$0xf] %v386
        %393 = vst [vmem:[#allocation3 + $0x8] sm:$0xf] %v387
        %394 = vst [vmem:[#allocation3 + $0x10] sm:$0xf] %v388
        %v395 = vld [vmem:[#allocation2] sm:$0xff]
        %v396 = vld [vmem:[#allocation2 + $0x8] sm:$0xff]
        %s399 = scalar_lea.vmem [#allocation1], 1
        %400 = vst [vmem:[%s399] ss:$2 sm:$0xff] %v395
        %s401 = scalar_lea.vmem [#allocation1], 17
        %402 = vst [vmem:[%s401] ss:$2 sm:$0xff] %v396
        %v403 = vld.sshfl [vmem:[#allocation1] sm:$0xff pattern:$0x75316420]
        %v404 = vld.sshfl [vmem:[#allocation1 + $0x8] sm:$0xff pattern:$0x75316420]
        %v405 = vld.sshfl [vmem:[#allocation1 + $0x10] sm:$0xff pattern:$0x75316420]
        %v406 = vld.sshfl [vmem:[#allocation1 + $0x18] sm:$0xff pattern:$0x75316420]
        %407 = vrot.lane.b32.xlu0 %v403, 127
        %v408 = vpop.permute.xlu0 %407
        %409 = vrot.lane.b32.xlu0 %v404, 127
        %v410 = vpop.permute.xlu0 %409
        %411 = vrot.lane.b32.xlu0 %v405, 127
        %v412 = vpop.permute.xlu0 %411
        %413 = vrot.lane.b32.xlu0 %v406, 127
        %v414 = vpop.permute.xlu0 %413
        %vm415 = vcmask 1039360
        %v416 = vsel %vm415, %v408, %v410
        %v417 = vsel %vm415, %v410, %v412
        %v418 = vsel %vm415, %v412, %v414
        %422 = vst [vmem:[#allocation3] sm:$0xf0] %v416
        %423 = vst [vmem:[#allocation3 + $0x8] sm:$0xf0] %v417
        %424 = vst [vmem:[#allocation3 + $0x10] sm:$0xf0] %v418
        %v425 = vld [vmem:[#allocation2] sm:$0xff]
        %v426 = vld [vmem:[#allocation2 + $0x8] sm:$0xff]
        %429 = vst [vmem:[#allocation1] ss:$2 sm:$0xff] %v425
        %s430 = scalar_lea.vmem [#allocation1], 16
        %431 = vst [vmem:[%s430] ss:$2 sm:$0xff] %v426
        %v432 = vld.sshfl [vmem:[#allocation1] sm:$0xff pattern:$0x75316420]
        %v433 = vld.sshfl [vmem:[#allocation1 + $0x8] sm:$0xff pattern:$0x75316420]
        %v434 = vld.sshfl [vmem:[#allocation1 + $0x10] sm:$0xff pattern:$0x75316420]
        %v435 = vld.sshfl [vmem:[#allocation1 + $0x18] sm:$0xff pattern:$0x75316420]
        %436 = vrot.lane.b32.xlu0 %v432, 126
        %v437 = vpop.permute.xlu0 %436
        %438 = vrot.lane.b32.xlu0 %v433, 126
        %v439 = vpop.permute.xlu0 %438
        %440 = vrot.lane.b32.xlu0 %v434, 126
        %v441 = vpop.permute.xlu0 %440
        %442 = vrot.lane.b32.xlu0 %v435, 126
        %v443 = vpop.permute.xlu0 %442
        %vm444 = vcmask 1031168
        %v445 = vsel %vm444, %v437, %v439
        %v446 = vsel %vm444, %v439, %v441
        %v447 = vsel %vm444, %v441, %v443
        %451 = vst [vmem:[#allocation3 + $0x18] sm:$0xf] %v445
        %452 = vst [vmem:[#allocation3 + $0x20] sm:$0xf] %v446
        %453 = vst [vmem:[#allocation3 + $0x28] sm:$0xf] %v447
        %v454 = vld [vmem:[#allocation2] sm:$0xff]
        %v455 = vld [vmem:[#allocation2 + $0x8] sm:$0xff]
        %s458 = scalar_lea.vmem [#allocation1], 1
        %459 = vst [vmem:[%s458] ss:$2 sm:$0xff] %v454
        %s460 = scalar_lea.vmem [#allocation1], 17
        %461 = vst [vmem:[%s460] ss:$2 sm:$0xff] %v455
        %v462 = vld.sshfl [vmem:[#allocation1] sm:$0xff pattern:$0x75316420]
        %v463 = vld.sshfl [vmem:[#allocation1 + $0x8] sm:$0xff pattern:$0x75316420]
        %v464 = vld.sshfl [vmem:[#allocation1 + $0x10] sm:$0xff pattern:$0x75316420]
        %v465 = vld.sshfl [vmem:[#allocation1 + $0x18] sm:$0xff pattern:$0x75316420]
        %466 = vrot.lane.b32.xlu0 %v462, 110
        %v467 = vpop.permute.xlu0 %466
        %468 = vrot.lane.b32.xlu0 %v463, 110
        %v469 = vpop.permute.xlu0 %468
        %470 = vrot.lane.b32.xlu0 %v464, 110
        %v471 = vpop.permute.xlu0 %470
        %472 = vrot.lane.b32.xlu0 %v465, 110
        %v473 = vpop.permute.xlu0 %472
        %vm474 = vcmask 900096
        %v475 = vsel %vm474, %v467, %v469
        %v476 = vsel %vm474, %v469, %v471
        %v477 = vsel %vm474, %v471, %v473
        %481 = vst [vmem:[#allocation3 + $0x18] sm:$0xf0] %v475
        %482 = vst [vmem:[#allocation3 + $0x20] sm:$0xf0] %v476
        %483 = vst [vmem:[#allocation3 + $0x28] sm:$0xf0] %v477
        %v484 = vld [vmem:[#allocation2] sm:$0xff]
        %v485 = vld [vmem:[#allocation2 + $0x8] sm:$0xff]
        %488 = vst [vmem:[#allocation1] ss:$2 sm:$0xff] %v484
        %s489 = scalar_lea.vmem [#allocation1], 16
        %490 = vst [vmem:[%s489] ss:$2 sm:$0xff] %v485
        %v491 = vld.sshfl [vmem:[#allocation1] sm:$0xff pattern:$0x75316420]
        %v492 = vld.sshfl [vmem:[#allocation1 + $0x8] sm:$0xff pattern:$0x75316420]
        %v493 = vld.sshfl [vmem:[#allocation1 + $0x10] sm:$0xff pattern:$0x75316420]
        %v494 = vld.sshfl [vmem:[#allocation1 + $0x18] sm:$0xff pattern:$0x75316420]
        %495 = vrot.lane.b32.xlu0 %v491, 109
        %v496 = vpop.permute.xlu0 %495
        %497 = vrot.lane.b32.xlu0 %v492, 109
        %v498 = vpop.permute.xlu0 %497
        %499 = vrot.lane.b32.xlu0 %v493, 109
        %v500 = vpop.permute.xlu0 %499
        %501 = vrot.lane.b32.xlu0 %v494, 109
        %v502 = vpop.permute.xlu0 %501
        %vm503 = vcmask 891904
        %v504 = vsel %vm503, %v496, %v498
        %v505 = vsel %vm503, %v498, %v500
        %v506 = vsel %vm503, %v500, %v502
        %510 = vst [vmem:[#allocation3 + $0x30] sm:$0xf] %v504
        %511 = vst [vmem:[#allocation3 + $0x38] sm:$0xf] %v505
        %512 = vst [vmem:[#allocation3 + $0x40] sm:$0xf] %v506
        %v513 = vld [vmem:[#allocation2] sm:$0xff]
        %v514 = vld [vmem:[#allocation2 + $0x8] sm:$0xff]
        %s517 = scalar_lea.vmem [#allocation1], 1
        %518 = vst [vmem:[%s517] ss:$2 sm:$0xff] %v513
        %s519 = scalar_lea.vmem [#allocation1], 17
        %520 = vst [vmem:[%s519] ss:$2 sm:$0xff] %v514
        %v521 = vld.sshfl [vmem:[#allocation1] sm:$0xff pattern:$0x75316420]
        %v522 = vld.sshfl [vmem:[#allocation1 + $0x8] sm:$0xff pattern:$0x75316420]
        %v523 = vld.sshfl [vmem:[#allocation1 + $0x10] sm:$0xff pattern:$0x75316420]
        %v524 = vld.sshfl [vmem:[#allocation1 + $0x18] sm:$0xff pattern:$0x75316420]
        %525 = vrot.lane.b32.xlu0 %v521, 108
        %v526 = vpop.permute.xlu0 %525
        %527 = vrot.lane.b32.xlu0 %v522, 108
        %v528 = vpop.permute.xlu0 %527
        %529 = vrot.lane.b32.xlu0 %v523, 108
        %v530 = vpop.permute.xlu0 %529
        %531 = vrot.lane.b32.xlu0 %v524, 108
        %v532 = vpop.permute.xlu0 %531
        %vm533 = vcmask 883712
        %v534 = vsel %vm533, %v526, %v528
        %v535 = vsel %vm533, %v528, %v530
        %v536 = vsel %vm533, %v530, %v532
        %540 = vst [vmem:[#allocation3 + $0x30] sm:$0xf0] %v534
        %541 = vst [vmem:[#allocation3 + $0x38] sm:$0xf0] %v535
        %542 = vst [vmem:[#allocation3 + $0x40] sm:$0xf0] %v536
        %v543 = vld [vmem:[#allocation2] sm:$0xff]
        %v544 = vld [vmem:[#allocation2 + $0x8] sm:$0xff]
        %547 = vst [vmem:[#allocation1] ss:$2 sm:$0xff] %v543
        %s548 = scalar_lea.vmem [#allocation1], 16
        %549 = vst [vmem:[%s548] ss:$2 sm:$0xff] %v544
        %v550 = vld.sshfl [vmem:[#allocation1] sm:$0xff pattern:$0x75316420]
        %v551 = vld.sshfl [vmem:[#allocation1 + $0x8] sm:$0xff pattern:$0x75316420]
        %v552 = vld.sshfl [vmem:[#allocation1 + $0x10] sm:$0xff pattern:$0x75316420]
        %v553 = vld.sshfl [vmem:[#allocation1 + $0x18] sm:$0xff pattern:$0x75316420]
        %554 = vrot.lane.b32.xlu0 %v550, 92
        %v555 = vpop.permute.xlu0 %554
        %556 = vrot.lane.b32.xlu0 %v551, 92
        %v557 = vpop.permute.xlu0 %556
        %558 = vrot.lane.b32.xlu0 %v552, 92
        %v559 = vpop.permute.xlu0 %558
        %560 = vrot.lane.b32.xlu0 %v553, 92
        %v561 = vpop.permute.xlu0 %560
        %vm562 = vcmask 752640
        %v563 = vsel %vm562, %v555, %v557
        %v564 = vsel %vm562, %v557, %v559
        %v565 = vsel %vm562, %v559, %v561
        %569 = vst [vmem:[#allocation3 + $0x48] sm:$0xf] %v563
        %570 = vst [vmem:[#allocation3 + $0x50] sm:$0xf] %v564
        %571 = vst [vmem:[#allocation3 + $0x58] sm:$0xf] %v565
        %v572 = vld [vmem:[#allocation2] sm:$0xff]
        %v573 = vld [vmem:[#allocation2 + $0x8] sm:$0xff]
        %s576 = scalar_lea.vmem [#allocation1], 1
        %577 = vst [vmem:[%s576] ss:$2 sm:$0xff] %v572
        %s578 = scalar_lea.vmem [#allocation1], 17
        %579 = vst [vmem:[%s578] ss:$2 sm:$0xff] %v573
        %v580 = vld.sshfl [vmem:[#allocation1] sm:$0xff pattern:$0x75316420]
        %v581 = vld.sshfl [vmem:[#allocation1 + $0x8] sm:$0xff pattern:$0x75316420]
        %v582 = vld.sshfl [vmem:[#allocation1 + $0x10] sm:$0xff pattern:$0x75316420]
        %v583 = vld.sshfl [vmem:[#allocation1 + $0x18] sm:$0xff pattern:$0x75316420]
        %584 = vrot.lane.b32.xlu0 %v580, 91
        %v585 = vpop.permute.xlu0 %584
        %586 = vrot.lane.b32.xlu0 %v581, 91
        %v587 = vpop.permute.xlu0 %586
        %588 = vrot.lane.b32.xlu0 %v582, 91
        %v589 = vpop.permute.xlu0 %588
        %590 = vrot.lane.b32.xlu0 %v583, 91
        %v591 = vpop.permute.xlu0 %590
        %vm592 = vcmask 744448
        %v593 = vsel %vm592, %v585, %v587
        %v594 = vsel %vm592, %v587, %v589
        %v595 = vsel %vm592, %v589, %v591
        %599 = vst [vmem:[#allocation3 + $0x48] sm:$0xf0] %v593
        %600 = vst [vmem:[#allocation3 + $0x50] sm:$0xf0] %v594
        %601 = vst [vmem:[#allocation3 + $0x58] sm:$0xf0] %v595
        %v602 = vld [vmem:[#allocation2] sm:$0xff]
        %v603 = vld [vmem:[#allocation2 + $0x8] sm:$0xff]
        %606 = vst [vmem:[#allocation1] ss:$2 sm:$0xff] %v602
        %s607 = scalar_lea.vmem [#allocation1], 16
        %608 = vst [vmem:[%s607] ss:$2 sm:$0xff] %v603
        %v609 = vld.sshfl [vmem:[#allocation1] sm:$0xff pattern:$0x75316420]
        %v610 = vld.sshfl [vmem:[#allocation1 + $0x8] sm:$0xff pattern:$0x75316420]
        %v611 = vld.sshfl [vmem:[#allocation1 + $0x10] sm:$0xff pattern:$0x75316420]
        %v612 = vld.sshfl [vmem:[#allocation1 + $0x18] sm:$0xff pattern:$0x75316420]
        %613 = vrot.lane.b32.xlu0 %v609, 90
        %v614 = vpop.permute.xlu0 %613
        %615 = vrot.lane.b32.xlu0 %v610, 90
        %v616 = vpop.permute.xlu0 %615
        %617 = vrot.lane.b32.xlu0 %v611, 90
        %v618 = vpop.permute.xlu0 %617
        %619 = vrot.lane.b32.xlu0 %v612, 90
        %v620 = vpop.permute.xlu0 %619
        %vm621 = vcmask 736256
        %v622 = vsel %vm621, %v614, %v616
        %v623 = vsel %vm621, %v616, %v618
        %v624 = vsel %vm621, %v618, %v620
        %628 = vst [vmem:[#allocation3 + $0x60] sm:$0xf] %v622
        %629 = vst [vmem:[#allocation3 + $0x68] sm:$0xf] %v623
        %630 = vst [vmem:[#allocation3 + $0x70] sm:$0xf] %v624
        %v631 = vld [vmem:[%s3] sm:$0x3]
        %v632 = vld [vmem:[#allocation3] sm:$0xff]
        %v633 = vld [vmem:[#allocation3 + $0x8] sm:$0xff]
        %v634 = vld [vmem:[#allocation3 + $0x10] sm:$0xff]
        %v635 = vld [vmem:[#allocation3 + $0x18] sm:$0xff]
        %v636 = vld [vmem:[#allocation3 + $0x20] sm:$0xff]
        %v637 = vld [vmem:[#allocation3 + $0x28] sm:$0xff]
        %v638 = vld [vmem:[#allocation3 + $0x30] sm:$0xff]
        %v639 = vld [vmem:[#allocation3 + $0x38] sm:$0xff]
        %v640 = vld [vmem:[#allocation3 + $0x40] sm:$0xff]
        %v641 = vld [vmem:[#allocation3 + $0x48] sm:$0xff]
        %v642 = vld [vmem:[#allocation3 + $0x50] sm:$0xff]
        %v643 = vld [vmem:[#allocation3 + $0x58] sm:$0xff]
        %v644 = vld [vmem:[#allocation3 + $0x60] sm:$0xf]
        %v645 = vld [vmem:[#allocation3 + $0x68] sm:$0xf]
        %v646 = vld [vmem:[#allocation3 + $0x70] sm:$0xf]
        %v647 = vpack.c.bf16 %v635, %v632
        %v648 = vpack.c.bf16 %v636, %v633
        %v649 = vpack.c.bf16 %v637, %v634
        %v650 = vpack.c.bf16 %v641, %v638
        %v651 = vpack.c.bf16 %v642, %v639
        %v652 = vpack.c.bf16 %v643, %v640
        %v653 = vpack.c.bf16 %v644, %v644
        %v654 = vpack.c.bf16 %v645, %v645
        %v655 = vpack.c.bf16 %v646, %v646
        %v656 = vld [vmem:[#allocation2] sm:$0xff]
        %v657 = vld [vmem:[#allocation2 + $0x8] sm:$0xff]
        %v658 = vld [vmem:[%s4] sm:$0xf]
        %660 = vset.pattern.permute.xlu0 0
        %661 = vperm.xlu0 %660, %v658
        %v662 = vpop.permute.xlu0 %661
        %vm664 = vcmask 293888
        %v666 = vsel %vm664, %v631, 0
        %vm668 = vcmask 1041408
        %v670 = vsel %vm668, %v653, 0
        %v673 = vsel %vm668, %v654, 0
        %v676 = vsel %vm668, %v655, 0
        %678 = vmatpush.bf16.msra.mxu0 0
        %679 = vmatpush.bf16.msra.mxu0 0
        %680 = vmatpush.bf16.msra.mxu0 0
        %681 = vmatpush.bf16.msra.mxu0 0
        %682 = vmatpush.bf16.msra.mxu0 0
        %683 = vmatpush.bf16.msra.mxu0 %v670
        %684 = vmatpush.bf16.msra.mxu0 %v650
        %685 = vmatpush.bf16.msra.mxu0 %v647
        %686 = vmatmul.bf16.gmra.mxu0 %v666
        %v687 = vpop.f32.mrf.mxu0
        %v688 = vadd.f32 %v662, %v687
        %v689 = vpop.f32.mrf.mxu0
        %690 = vdwg.mxu0
        %691 = vmatpush.bf16.msra.mxu0 0
        %692 = vmatpush.bf16.msra.mxu0 0
        %693 = vmatpush.bf16.msra.mxu0 0
        %694 = vmatpush.bf16.msra.mxu0 0
        %695 = vmatpush.bf16.msra.mxu0 0
        %696 = vmatpush.bf16.msra.mxu0 %v673
        %697 = vmatpush.bf16.msra.mxu0 %v651
        %698 = vmatpush.bf16.msra.mxu0 %v648
        %699 = vmatmul.bf16.gmra.mxu0 %v666
        %v700 = vpop.f32.mrf.mxu0
        %v701 = vadd.f32 %v662, %v700
        %v702 = vpop.f32.mrf.mxu0
        %703 = vdwg.mxu0
        %704 = vmatpush.bf16.msra.mxu0 0
        %705 = vmatpush.bf16.msra.mxu0 0
        %706 = vmatpush.bf16.msra.mxu0 0
        %707 = vmatpush.bf16.msra.mxu0 0
        %708 = vmatpush.bf16.msra.mxu0 0
        %709 = vmatpush.bf16.msra.mxu0 %v676
        %710 = vmatpush.bf16.msra.mxu0 %v652
        %711 = vmatpush.bf16.msra.mxu0 %v649
        %712 = vmatmul.bf16.gmra.mxu0 %v666
        %v713 = vpop.f32.mrf.mxu0
        %v714 = vadd.f32 %v662, %v713
        %v715 = vpop.f32.mrf.mxu0
        %716 = vdwg.mxu0
        %v717 = vmax.f32 %v688, 0.0
        %v718 = vmax.f32 %v701, 0.0
        %v719 = vmax.f32 %v714, 0.0
        %722 = vst [vmem:[#allocation1] ss:$2 sm:$0xff] %v656
        %s723 = scalar_lea.vmem [#allocation1], 16
        %724 = vst [vmem:[%s723] ss:$2 sm:$0xff] %v657
        %v725 = vld.sshfl [vmem:[#allocation1] sm:$0xff pattern:$0x75316420]
        %v726 = vld.sshfl [vmem:[#allocation1 + $0x8] sm:$0xff pattern:$0x75316420]
        %v727 = vld.sshfl [vmem:[#allocation1 + $0x10] sm:$0xff pattern:$0x75316420]
        %v728 = vld.sshfl [vmem:[#allocation1 + $0x18] sm:$0xff pattern:$0x75316420]
        %729 = vrot.lane.b32.xlu0 %v725, 109
        %v730 = vpop.permute.xlu0 %729
        %731 = vrot.lane.b32.xlu0 %v726, 109
        %v732 = vpop.permute.xlu0 %731
        %733 = vrot.lane.b32.xlu0 %v727, 109
        %v734 = vpop.permute.xlu0 %733
        %735 = vrot.lane.b32.xlu0 %v728, 109
        %v736 = vpop.permute.xlu0 %735
        %v737 = vsel %vm503, %v730, %v732
        %v738 = vsel %vm503, %v732, %v734
        %v739 = vsel %vm503, %v734, %v736
        %v743 = vadd.f32 %v717, %v737
        %v744 = vadd.f32 %v718, %v738
        %v745 = vadd.f32 %v719, %v739
        %v748 = vrot.slane %v744, 4
        %vm749 = vcmask 1043456
        %v750 = vsel %vm749, %v743, %v748
        %752 = vst [vmem:[%s341] sm:$0xff] %v750
        %753 = vst [vmem:[%s341 + $0x8] sm:$0xf] %v745
        %s754 = sand.u32 %s173, 1
        %s755 = scalar_lea.sflag [#allocation6], %s754
        %s756 = sand.u32 %s173, 1
        %s757 = smul.addr %s756, 12
        %s758 = scalar_lea.vmem [#allocation10], %s757
        // Predicated region
        $region53: #{tpu_custom_call.1} parent=39 // pred_check
          %p759 = pneg %p183
        $region54: #{tpu_custom_call.1} parent=39 // pred_check_branch
          %761 = sbr.rel (%p759) target = $region56
        $region55: #{tpu_custom_call.1} parent=39 // pred_region
          %s762 = smul.u32 3, %s30
          %764 = vsyncadd %s755, 0
          %s765 = smul.addr %s29, 3
          %s766 = sadd.s32 %s762, %s765
          %s767 = smul.addr %s766, 4
          %s768 = scalar_lea.hbm %s5, %s767
          %s770 = sshll.u32 %s758, 4
          %s771 = int_to_ptr.vmem [resolvable:$true] %s770
          %s772 = sshll.u32 %s768, 4
          %s773 = int_to_ptr.hbm [resolvable:$true] %s772
          %775 = dma.vmem_to_hbm [thread:$0]  %s771, 192, %s773, %s755
        $region56: #{tpu_custom_call.1} parent=39 // pred_fallthru
          _
      $region40: #{tpu_custom_call.1} parent=5 // pred_fallthru
        _
      %p776 = scmp.le.s32.totalorder 2, %s20
      // Predicated region
      $region57: #{tpu_custom_call.1} parent=5 // pred_check
        %p777 = pneg %p776
      $region58: #{tpu_custom_call.1} parent=5 // pred_check_branch
        %779 = sbr.rel (%p777) target = $region60
      $region59: #{tpu_custom_call.1} parent=5 // pred_region
        %s780 = ssub.s32 %s20, 2
        // Predicated region
        $region61: #{tpu_custom_call.1} parent=59 // pred_check
          %p781 = pneg %p189
        $region62: #{tpu_custom_call.1} parent=59 // pred_check_branch
          %783 = sbr.rel (%p781) target = $region64
        $region63: #{tpu_custom_call.1} parent=59 // pred_region
          %s784 = sand.u32 %s174, 1
          %s785 = scalar_lea.sflag [#allocation6], %s784
          %s786 = sand.u32 %s174, 1
          %s787 = smul.addr %s786, 12
          %s788 = scalar_lea.vmem [#allocation10], %s787
          %790 = dma.done %s785, 192
        $region64: #{tpu_custom_call.1} parent=59 // pred_fallthru
          _
      $region60: #{tpu_custom_call.1} parent=5 // pred_fallthru
        _
    $region6: #{tpu_custom_call.1} parent=1 // loop_footer
      %s24 = sadd.s32 1, %s20
    $region7: #{tpu_custom_call.1} parent=1 // loop_footer_branch
      %19 = sbr.rel target = $region3
    $region8: #{tpu_custom_call.1} parent=1 // loop_exit
      _
    %791 = vsyncpa [#allocation5], 1
    %s792 = scalar_lea.sflag [#allocation5], 1
    %793 = vsyncpa %s792, 1
    %794 = vsyncpa [#allocation8], 1
    %s795 = scalar_lea.sflag [#allocation8], 1
    %796 = vsyncpa %s795, 1
    %797 = vsyncpa [#allocation6], 1
    %s798 = scalar_lea.sflag [#allocation6], 1
    %799 = vsyncpa %s798, 1

</llo_original>
